<compile_context>
chip_gen: v6e
topology: v6e:2x2x1
jax: 0.10.0
libtpu: 0.0.40
codegen_flags: <defaults>
</compile_context>

<pallas_src>
import jax
import jax.numpy as jnp
from jax.experimental import pallas as pl
from jax.experimental.pallas import tpu as pltpu


_VMEM = pl.BlockSpec(memory_space=pltpu.MemorySpace.VMEM)

# Batch size at/above which we switch from the gridless VPU kernel to the
# tiled MXU kernel.
_TILED_BATCH_THRESHOLD = 128
_ROW_TILE = 256


# ---------------------------------------------------------------------------
# Small-batch kernel: gridless, VPU only (no MXU, no concat, no lane slices).
# ---------------------------------------------------------------------------
def _linear_small_kernel(x_ref, w_ref, o_ref):
    # x: (B, F), w: (A, F)  ->  o: (B, A) = x @ w.T
    # A is tiny (e.g. 2): unroll over output columns; each column is a
    # broadcast-multiply against one weight row + a cross-lane reduce.
    x = x_ref[...]
    for a in range(w_ref.shape[0]):          # static Python unroll
        wa = w_ref[a:a + 1, :]               # (1, F) sublane row read
        o_ref[:, a:a + 1] = jnp.sum(x * wa, axis=-1, keepdims=True)


@jax.jit
def _linear_small(x, w):
    B, _ = x.shape
    A = w.shape[0]
    return pl.pallas_call(
        _linear_small_kernel,
        out_shape=jax.ShapeDtypeStruct((B, A), jnp.float32),
        in_specs=[_VMEM, _VMEM],
        out_specs=_VMEM,
    )(x, w)


# ---------------------------------------------------------------------------
# Large-batch kernel: grid over B, MXU dot against pre-transposed weight.
# ---------------------------------------------------------------------------
def _linear_tiled_kernel(x_ref, wt_ref, o_ref):
    # x tile: (tB, F), wt: (F, A)  ->  o tile: (tB, A)
    o_ref[...] = jnp.dot(x_ref[...], wt_ref[...],
                         preferred_element_type=jnp.float32)


@jax.jit
def _linear_tiled(x, wt):
    B, F = x.shape
    A = wt.shape[1]
    tb = _ROW_TILE
    pad = (-B) % tb
    if pad:
        x = jnp.pad(x, ((0, pad), (0, 0)))
    Bp = B + pad
    out = pl.pallas_call(
        _linear_tiled_kernel,
        out_shape=jax.ShapeDtypeStruct((Bp, A), jnp.float32),
        grid=(Bp // tb,),
        in_specs=[pl.BlockSpec((tb, F), lambda i: (i, 0)),
                  pl.BlockSpec((F, A), lambda i: (0, 0))],
        out_specs=pl.BlockSpec((tb, A), lambda i: (i, 0)),
        compiler_params=pltpu.CompilerParams(
            dimension_semantics=("parallel",)),
    )(x, wt)
    return out[:B] if pad else out


# ---------------------------------------------------------------------------
# Module-equivalent wrapper (parameter setup + forward).
# ---------------------------------------------------------------------------
class ShallowRLAuditoryDiscriminationNetwork:
    """JAX/Pallas port of the PyTorch module.

    Parameters are initialized uniform [0, 0.01), mirroring
    nn.init.uniform_(a=0.0, b=0.01).
    """

    def __init__(self, key, rpe_type="full", num_notes=7, num_actions=2):
        self.rpe_type = rpe_type
        self.num_notes = num_notes
        self.num_actions = num_actions
        if rpe_type == "partial":
            k1, k2 = jax.random.split(key)
            self.l1_weights_const = jax.random.uniform(
                k1, (num_actions, 1), jnp.float32, 0.0, 0.01)
            self.l1_weights_stim = jax.random.uniform(
                k2, (num_actions, num_notes), jnp.float32, 0.0, 0.01)
            # Constant-fold the forward-pass concat: it only changes when the
            # parameters change, so fuse it once here, not per call.
            w = jnp.concatenate(
                (self.l1_weights_const, self.l1_weights_stim), axis=1)
        else:
            # nn.Linear(num_notes + 1, num_actions, bias=False).weight has
            # shape (num_actions, num_notes + 1).
            w = jax.random.uniform(
                key, (num_actions, num_notes + 1), jnp.float32, 0.0, 0.01)
            self.l1_weights = w
        self._w = w        # (A, F): row layout used by the small VPU kernel
        self._wt = w.T     # (F, A): pre-transposed once for the MXU path

    def forward(self, x):
        """x: (F,) or (B, F) with F = num_notes + 1 -> (A,) or (B, A)."""
        squeeze = x.ndim == 1
        if squeeze:
            x = x[None, :]
        if x.dtype != jnp.float32:
            x = x.astype(jnp.float32)
        if x.shape[0] >= _TILED_BATCH_THRESHOLD:
            out = _linear_tiled(x, self._wt)
        else:
            out = _linear_small(x, self._w)
        return out[0] if squeeze else out

    def __call__(self, x):
        return self.forward(x)


if __name__ == "__main__":
    key = jax.random.PRNGKey(0)
    k_full, k_part, k_in, k_big = jax.random.split(key, 4)

    num_notes, num_actions, batch = 7, 2, 4

    stim = jax.random.normal(k_in, (batch, num_notes), jnp.float32)
    x = jnp.concatenate([jnp.ones((batch, 1), jnp.float32), stim], axis=1)

    # "full" RPE variant
    net_full = ShallowRLAuditoryDiscriminationNetwork(
        k_full, "full", num_notes, num_actions)
    out_full = jax.block_until_ready(net_full(x))
    ref_full = x @ net_full.l1_weights.T
    assert out_full.shape == (batch, num_actions)
    assert jnp.allclose(out_full, ref_full, atol=1e-5, rtol=1e-5)

    # "partial" RPE variant (concat constant-folded at init)
    net_part = ShallowRLAuditoryDiscriminationNetwork(
        k_part, "partial", num_notes, num_actions)
    out_part = jax.block_until_ready(net_part(x))
    ref_part = x @ jnp.concatenate(
        (net_part.l1_weights_const, net_part.l1_weights_stim), axis=1).T
    assert out_part.shape == (batch, num_actions)
    assert jnp.allclose(out_part, ref_part, atol=1e-5, rtol=1e-5)

    # Single (unbatched) input, as in the original docstring.
    out_1d = jax.block_until_ready(net_full(x[0]))
    assert out_1d.shape == (num_actions,)
    assert jnp.allclose(out_1d, ref_full[0], atol=1e-5, rtol=1e-5)

    out_1d_p = jax.block_until_ready(net_part(x[0]))
    assert out_1d_p.shape == (num_actions,)
    assert jnp.allclose(out_1d_p, ref_part[0], atol=1e-5, rtol=1e-5)

    # Large-batch (gridded, MXU) path, exercised once for coverage; batch is
    # deliberately not a multiple of the row tile to exercise padding.
    big_b = 300
    stim_big = jax.random.normal(k_big, (big_b, num_notes), jnp.float32)
    x_big = jnp.concatenate(
        [jnp.ones((big_b, 1), jnp.float32), stim_big], axis=1)
    out_big = jax.block_until_ready(net_full(x_big))
    ref_big = x_big @ net_full.l1_weights.T
    assert out_big.shape == (big_b, num_actions)
    assert jnp.allclose(out_big, ref_big, atol=1e-4, rtol=1e-4)

    print("KERNEL_OK")
</pallas_src>

<mosaic_0001>
module attributes {stable_mosaic.version = 11 : i64} {
  func.func @_linear_small_kernel(%arg0: memref<4x8xf32, #tpu.memory_space<vmem>>, %arg1: memref<2x8xf32, #tpu.memory_space<vmem>>, %arg2: memref<4x2xf32, #tpu.memory_space<vmem>>) attributes {dimension_semantics = [], scalar_prefetch = 0 : i64, scratch_operands = 0 : i64, tpu.core_type = #tpu.core_type<tc>} {
    %c0 = arith.constant 0 : index
    %c0_0 = arith.constant 0 : index
    %0 = vector.load %arg0[%c0, %c0_0] : memref<4x8xf32, #tpu.memory_space<vmem>>, vector<4x8xf32>
    %c0_1 = arith.constant 0 : index
    %c0_2 = arith.constant 0 : index
    %1 = vector.load %arg1[%c0_1, %c0_2] : memref<2x8xf32, #tpu.memory_space<vmem>>, vector<1x8xf32>
    %2 = vector.broadcast %1 : vector<1x8xf32> to vector<4x8xf32>
    %3 = arith.mulf %0, %2 : vector<4x8xf32>
    %cst = arith.constant dense<0.000000e+00> : vector<4xf32>
    %4 = vector.multi_reduction <add>, %3, %cst [1] : vector<4x8xf32> to vector<4xf32>
    %5 = vector.shape_cast %4 : vector<4xf32> to vector<4x1xf32>
    %c0_3 = arith.constant 0 : index
    %c0_4 = arith.constant 0 : index
    %6 = vector.load %arg2[%c0_3, %c0_4] : memref<4x2xf32, #tpu.memory_space<vmem>>, vector<4x1xf32>
    tpu.vector_store %arg2[%c0_3, %c0_4], %5 {strides = array<i32>} : memref<4x2xf32, #tpu.memory_space<vmem>>, vector<4x1xf32>,
    %c1 = arith.constant 1 : index
    %c0_5 = arith.constant 0 : index
    %7 = vector.load %arg1[%c1, %c0_5] : memref<2x8xf32, #tpu.memory_space<vmem>>, vector<1x8xf32>
    %8 = vector.broadcast %7 : vector<1x8xf32> to vector<4x8xf32>
    %9 = arith.mulf %0, %8 : vector<4x8xf32>
    %cst_6 = arith.constant dense<0.000000e+00> : vector<4xf32>
    %10 = vector.multi_reduction <add>, %9, %cst_6 [1] : vector<4x8xf32> to vector<4xf32>
    %11 = vector.shape_cast %10 : vector<4xf32> to vector<4x1xf32>
    %c0_7 = arith.constant 0 : index
    %c1_8 = arith.constant 1 : index
    %12 = vector.load %arg2[%c0_7, %c1_8] : memref<4x2xf32, #tpu.memory_space<vmem>>, vector<4x1xf32>
    tpu.vector_store %arg2[%c0_7, %c1_8], %11 {strides = array<i32>} : memref<4x2xf32, #tpu.memory_space<vmem>>, vector<4x1xf32>,
    return
  }
}

</mosaic_0001>

<llo_original>
// kernel: _linear_small.1
$region0: #{_linear_small.1}
  #allocation0 [shape = 'u32[]', space=smem, size = 0x4, offset = 0x4, fixed_abs, tag = 'smem constant byte address 0x4 - core index']
  #allocation1 [shape = 'u32[144,128]{1,0:T(1,128)}', space=vmem, size = 0x12000, scoped, tag = 'internal scratch']
  %s0 = inlined_call_operand.hbm [shape: f32[4,8], index: 0, kind: input, shape index: {}]
  %s1 = inlined_call_operand.hbm [shape: f32[2,8], index: 1, kind: input, shape index: {}]
  %s2 = inlined_call_operand.vmem [shape: f32[4,2], index: 2, kind: output, shape index: {}]
  %s3 = sld [smem:[#allocation0]]
  $region26: #{_linear_small.1} parent=0
    _
  %s5 = ssub.s32 1, %s3
  %s6 = scalar_select 0, %s5, %s3
  $region1: #{_linear_small.1} parent=0
    #allocation2 [shape = 'u8[2048]{0}', space=vmem, size = 0x800, scoped, tag = 'input window, operand 0, single buffered']
    #allocation3 [shape = 's32[1]{0}', space=sflag, size = 0x4, scoped, tag = 'scoped memory for _linear_small.1']
    #allocation4 [shape = 'u8[1024]{0}', space=vmem, size = 0x400, scoped, tag = 'input window, operand 1, single buffered']
    #allocation5 [shape = 's32[1]{0}', space=sflag, size = 0x4, scoped, tag = 'scoped memory for _linear_small.1']
    %7 = vsyncpa [#allocation3], 0
    %8 = vsyncpa [#allocation5], 0
    // Predicated region
    $region2: #{_linear_small.1} parent=1 // pred_check
      _
    $region3: #{_linear_small.1} parent=1 // pred_check_branch
      %10 = sbr.rel (0) target = $region5
    $region4: #{_linear_small.1} parent=1 // pred_region
      %s12 = ssub.s32 64, 64
      %13 = vsyncadd [#allocation3], %s12
      %s15 = sshll.u32 [#allocation2], 4
      %s16 = int_to_ptr.vmem [resolvable:$true] %s15
      %18 = dma.hbm_to_vmem [thread:$0]  %s0, 64, %s16, [#allocation3]
    $region5: #{_linear_small.1} parent=1 // pred_fallthru
      _
    // Predicated region
    $region6: #{_linear_small.1} parent=1 // pred_check
      _
    $region7: #{_linear_small.1} parent=1 // pred_check_branch
      %20 = sbr.rel (0) target = $region9
    $region8: #{_linear_small.1} parent=1 // pred_region
      %s22 = ssub.s32 32, 32
      %23 = vsyncadd [#allocation5], %s22
      %s25 = sshll.u32 [#allocation4], 4
      %s26 = int_to_ptr.vmem [resolvable:$true] %s25
      %28 = dma.hbm_to_vmem [thread:$0]  %s1, 32, %s26, [#allocation5]
    $region9: #{_linear_small.1} parent=1 // pred_fallthru
      _
    // Predicated region
    $region10: #{_linear_small.1} parent=1 // pred_check
      _
    $region11: #{_linear_small.1} parent=1 // pred_check_branch
      %30 = sbr.rel (0) target = $region13
    $region12: #{_linear_small.1} parent=1 // pred_region
      %31 = dma.done [#allocation3], 64
    $region13: #{_linear_small.1} parent=1 // pred_fallthru
      _
    // Predicated region
    $region14: #{_linear_small.1} parent=1 // pred_check
      _
    $region15: #{_linear_small.1} parent=1 // pred_check_branch
      %33 = sbr.rel (0) target = $region17
    $region16: #{_linear_small.1} parent=1 // pred_region
      %34 = dma.done [#allocation5], 32
    $region17: #{_linear_small.1} parent=1 // pred_fallthru
      _
    %v35 = vld [vmem:[#allocation2] sm:$0xf]
    %v36 = vld [vmem:[#allocation4] sm:$0x1]
    %v37 = vlaneseq
    %v38 = vshrl.u32 %v37, 7
    %v39 = vsub.s32 0, %v38
    %v40 = vrot.slane %v36, %v39
    %v41 = vmul.f32 %v35, %v40
    %vm42 = vcmask 60416
    %v43 = vsel %vm42, %v41, 0.0
    %44 = vadd.xlane.f32.xlu0 %v43
    %v45 = vpop.xlane.xlu0 %44
    %vm46 = vcmask 3072
    %47 = vst.msk [vmem:[%s2] sm:$0xf] %vm46, %v45
    %v48 = vld [vmem:[#allocation4 + $0x1] sm:$0x1]
    %v49 = vlaneseq
    %v50 = vshrl.u32 %v49, 7
    %v51 = vsub.s32 0, %v50
    %v52 = vrot.slane %v48, %v51
    %v53 = vmul.f32 %v35, %v52
    %v54 = vsel %vm42, %v53, 0.0
    %55 = vadd.xlane.f32.xlu0 %v54
    %v56 = vpop.xlane.xlu0 %55
    %vm57 = vcmask 11272
    %58 = vst.msk [vmem:[%s2] sm:$0xf] %vm57, %v56
    // Predicated region
    $region18: #{_linear_small.1} parent=1 // pred_check
      _
    $region19: #{_linear_small.1} parent=1 // pred_check_branch
      %60 = sbr.rel (0) target = $region21
    $region20: #{_linear_small.1} parent=1 // pred_region
      _
    $region21: #{_linear_small.1} parent=1 // pred_fallthru
      _
    // Predicated region
    $region22: #{_linear_small.1} parent=1 // pred_check
      _
    $region23: #{_linear_small.1} parent=1 // pred_check_branch
      %62 = sbr.rel (0) target = $region25
    $region24: #{_linear_small.1} parent=1 // pred_region
      _
    $region25: #{_linear_small.1} parent=1 // pred_fallthru
      _
    %63 = vsyncpa [#allocation3], 1
    %64 = vsyncpa [#allocation5], 1

</llo_original>
